<compile_context>
chip_gen: v5e
topology: v5e:2x2
jax: 0.10.0
libtpu: 0.0.40
codegen_flags: <defaults>
</compile_context>

<pallas_src>
import math
from typing import NamedTuple

import jax
import jax.numpy as jnp
from jax.experimental import pallas as pl
from jax.experimental.pallas import tpu as pltpu


def _round_up(x: int, m: int) -> int:
    return (x + m - 1) // m * m


# --------------------------------------------------------------------------
# Kernel
# --------------------------------------------------------------------------
def _noisy_linear_kernel(x_ref, eps_in_ref, wmu_ref, wsig_ref, eps_out_ref,
                         b_ref, o_ref, acc_mu_ref, acc_sig_ref):
    # grid = (i over B tiles [parallel], j over OUT tiles [parallel],
    #         k over K tiles [arbitrary, last])
    k = pl.program_id(2)

    x = x_ref[...]                               # (tm, tk) f32
    xn = x * eps_in_ref[...]                     # factorized input noise (VPU)
    # Cast only at the MXU boundary; accumulate in f32.
    x_lo = x.astype(wmu_ref.dtype)
    xn_lo = xn.astype(wsig_ref.dtype)

    y_mu = jnp.dot(x_lo, wmu_ref[...], preferred_element_type=jnp.float32)
    y_sig = jnp.dot(xn_lo, wsig_ref[...], preferred_element_type=jnp.float32)

    @pl.when(k == 0)
    def _():
        acc_mu_ref[...] = y_mu                   # write-through, no zero+add
        acc_sig_ref[...] = y_sig

    @pl.when(k > 0)
    def _():
        acc_mu_ref[...] += y_mu
        acc_sig_ref[...] += y_sig

    @pl.when(k == pl.num_programs(2) - 1)
    def _():
        # eps_out scaling + bias add only once, at finalize.
        o_ref[...] = (acc_mu_ref[...] + eps_out_ref[...] * acc_sig_ref[...]
                      + b_ref[...]).astype(o_ref.dtype)


# --------------------------------------------------------------------------
# One-time parameter packing (hoisted out of the forward path)
# --------------------------------------------------------------------------
class NoisyLinearParams(NamedTuple):
    wmu_t: jax.Array      # [Kp, Np] bf16, pre-transposed + padded
    wsig_t: jax.Array     # [Kp, Np] bf16, pre-transposed + padded
    bias_mu: jax.Array    # [OUT] f32
    bias_sigma: jax.Array  # [OUT] f32
    in_features: int
    out_features: int
    tn: int
    tk: int
    kp: int
    np_: int


def _select_tiles(in_features, out_features, *, tn_max, tk_max):
    kd = _round_up(in_features, 128)
    nd = _round_up(out_features, 128)
    tk = min(tk_max, kd)
    if nd >= 256:
        # Keep >= 2 OUT tiles so v7x's second TensorCore gets work on the
        # 'parallel' OUT grid axis.
        tn = min(tn_max, _round_up((nd + 1) // 2, 128))
    else:
        tn = nd
    kp = _round_up(in_features, tk)
    np_ = _round_up(out_features, tn)
    return tn, tk, np_, kp


def prepare_noisy_linear(weight_mu, weight_sigma, bias_mu, bias_sigma, *,
                         weights_dtype=jnp.bfloat16,
                         tn_max=1024, tk_max=2048) -> NoisyLinearParams:
    """Cacheable: transpose to [K, N], cast to bf16, pad to tile multiples."""
    out_f, in_f = weight_mu.shape
    tn, tk, np_, kp = _select_tiles(in_f, out_f, tn_max=tn_max, tk_max=tk_max)

    def pack(w):
        wt = w.T.astype(weights_dtype)           # [IN, OUT], MXU-native layout
        if (in_f, out_f) != (kp, np_):
            wt = jnp.zeros((kp, np_), weights_dtype).at[:in_f, :out_f].set(wt)
        return wt

    return NoisyLinearParams(pack(weight_mu), pack(weight_sigma),
                             bias_mu.astype(jnp.float32),
                             bias_sigma.astype(jnp.float32),
                             in_f, out_f, tn, tk, kp, np_)


# --------------------------------------------------------------------------
# Forward
# --------------------------------------------------------------------------
def noisy_linear_forward(x, params: NoisyLinearParams, eps_in, eps_out, *,
                         tm_max=256, vmem_limit_bytes=48 * 1024 * 1024):
    """x: [B, IN] (any float dtype); returns [B, OUT] f32."""
    B = x.shape[0]
    IN, OUT = params.in_features, params.out_features
    tn, tk, Np, Kp = params.tn, params.tk, params.np_, params.kp

    tm = min(tm_max, _round_up(B, 8))
    Bp = _round_up(B, tm)

    x = x.astype(jnp.float32)
    if (B, IN) != (Bp, Kp):                      # skip copy when aligned
        x = jnp.zeros((Bp, Kp), jnp.float32).at[:B, :IN].set(x)

    # Per-call (reset_noise-dependent) vectors: O(IN)+O(OUT) only.
    eps_in_row = jnp.zeros((1, Kp), jnp.float32).at[0, :IN].set(
        eps_in.astype(jnp.float32))
    eps_out_row = jnp.zeros((1, Np), jnp.float32).at[0, :OUT].set(
        eps_out.astype(jnp.float32))
    b_row = jnp.zeros((1, Np), jnp.float32).at[0, :OUT].set(
        params.bias_mu + params.bias_sigma * eps_out.astype(jnp.float32))

    grid = (Bp // tm, Np // tn, Kp // tk)        # K (reduction) axis last.

    out = pl.pallas_call(
        _noisy_linear_kernel,
        out_shape=jax.ShapeDtypeStruct((Bp, Np), jnp.float32),
        grid=grid,
        in_specs=[
            pl.BlockSpec((tm, tk), lambda i, j, k: (i, k)),   # x
            pl.BlockSpec((1, tk), lambda i, j, k: (0, k)),    # eps_in row
            pl.BlockSpec((tk, tn), lambda i, j, k: (k, j)),   # weight_mu^T
            pl.BlockSpec((tk, tn), lambda i, j, k: (k, j)),   # weight_sigma^T
            pl.BlockSpec((1, tn), lambda i, j, k: (0, j)),    # eps_out row
            pl.BlockSpec((1, tn), lambda i, j, k: (0, j)),    # folded bias row
        ],
        out_specs=pl.BlockSpec((tm, tn), lambda i, j, k: (i, j)),
        scratch_shapes=[pltpu.VMEM((tm, tn), jnp.float32),    # acc (mu path)
                        pltpu.VMEM((tm, tn), jnp.float32)],   # acc (sigma path)
        compiler_params=pltpu.CompilerParams(
            dimension_semantics=("parallel", "parallel", "arbitrary"),
            vmem_limit_bytes=vmem_limit_bytes),
    )(x, eps_in_row, params.wmu_t, params.wsig_t, eps_out_row, b_row)

    return out[:B, :OUT]


# --------------------------------------------------------------------------
# Noise sampling (reset_noise analogue, plain JAX glue)
# --------------------------------------------------------------------------
def _scale_noise(key, size):
    n = jax.random.normal(key, (size,), dtype=jnp.float32)
    return jnp.sign(n) * jnp.sqrt(jnp.abs(n))


# --------------------------------------------------------------------------
# Demo / self-check
# --------------------------------------------------------------------------
if __name__ == "__main__":
    IN_FEATURES = 160
    OUT_FEATURES = 192
    BATCH = 8
    SIGMA_INIT = 0.5

    key = jax.random.PRNGKey(0)
    k_x, k_wmu, k_bmu, k_n0, k_n1 = jax.random.split(key, 5)

    # Deterministic parameter init mirroring NoisyLinear.reset_parameters().
    mu_range = 1.0 / math.sqrt(IN_FEATURES)
    weight_mu = jax.random.uniform(
        k_wmu, (OUT_FEATURES, IN_FEATURES), jnp.float32,
        minval=-mu_range, maxval=mu_range)
    bias_mu = jax.random.uniform(
        k_bmu, (OUT_FEATURES,), jnp.float32, minval=-mu_range, maxval=mu_range)
    weight_sigma = jnp.full((OUT_FEATURES, IN_FEATURES),
                            SIGMA_INIT / math.sqrt(IN_FEATURES), jnp.float32)
    bias_sigma = jnp.full((OUT_FEATURES,),
                          SIGMA_INIT / math.sqrt(OUT_FEATURES), jnp.float32)

    x = jax.random.normal(k_x, (BATCH, IN_FEATURES), dtype=jnp.float32)

    def check(y, eps_in, eps_out):
        y = jax.block_until_ready(y)
        assert y.shape == (BATCH, OUT_FEATURES)
        b_ref = bias_mu + bias_sigma * eps_out
        # Reference 1: exact module semantics in f32 (loose tolerance — the
        # kernel streams weights/activations through bf16 MXU operands).
        w_ref = weight_mu + weight_sigma * (eps_out[:, None] * eps_in[None, :])
        y_f32 = x @ w_ref.T + b_ref[None, :]
        assert jnp.allclose(y, y_f32, atol=5e-2, rtol=5e-2), \
            "mismatch vs f32 module reference"
        # Reference 2: bit-faithful model of the kernel (bf16 MXU operands,
        # f32 accumulation) — tight tolerance.
        f32 = jnp.float32
        wmu_bf = weight_mu.astype(jnp.bfloat16).astype(f32)
        wsig_bf = weight_sigma.astype(jnp.bfloat16).astype(f32)
        x_bf = x.astype(jnp.bfloat16).astype(f32)
        xn_bf = (x * eps_in[None, :]).astype(jnp.bfloat16).astype(f32)
        y_bf = (x_bf @ wmu_bf.T + eps_out[None, :] * (xn_bf @ wsig_bf.T)
                + b_ref[None, :])
        assert jnp.allclose(y, y_bf, atol=1e-3, rtol=1e-3), \
            "mismatch vs bf16-faithful reference"

    # --- Cached weight packing (done ONCE, reused across forwards) ---------
    params = prepare_noisy_linear(weight_mu, weight_sigma, bias_mu, bias_sigma)

    # Training-mode forward: fresh factorized noise per call (reset_noise()).
    for k_noise in (k_n0, k_n1):
        ka, kb = jax.random.split(k_noise)
        eps_in = _scale_noise(ka, IN_FEATURES)
        eps_out = _scale_noise(kb, OUT_FEATURES)
        y = noisy_linear_forward(x, params, eps_in, eps_out)
        check(y, eps_in, eps_out)

    # Small-tile configuration: forces a (1, 2, 2) grid (2 OUT tiles x 2 K
    # tiles) to exercise padding, the K accumulators and the finalize path.
    params_small = prepare_noisy_linear(weight_mu, weight_sigma, bias_mu,
                                        bias_sigma, tn_max=128, tk_max=128)
    eps_in = _scale_noise(jax.random.PRNGKey(7), IN_FEATURES)
    eps_out = _scale_noise(jax.random.PRNGKey(8), OUT_FEATURES)
    y = noisy_linear_forward(x, params_small, eps_in, eps_out, tm_max=8)
    check(y, eps_in, eps_out)

    print("KERNEL_OK")
</pallas_src>

<mosaic_0001>
module attributes {stable_mosaic.version = 11 : i64} {
  func.func @_noisy_linear_kernel(%arg0: i32, %arg1: i32, %arg2: i32, %arg3: memref<8x256xf32, #tpu.memory_space<vmem>>, %arg4: memref<1x256xf32, #tpu.memory_space<vmem>>, %arg5: memref<256x128xbf16, #tpu.memory_space<vmem>>, %arg6: memref<256x128xbf16, #tpu.memory_space<vmem>>, %arg7: memref<1x128xf32, #tpu.memory_space<vmem>>, %arg8: memref<1x128xf32, #tpu.memory_space<vmem>>, %arg9: memref<8x128xf32, #tpu.memory_space<vmem>>, %arg10: memref<8x128xf32, #tpu.memory_space<vmem>>, %arg11: memref<8x128xf32, #tpu.memory_space<vmem>>) attributes {dimension_semantics = [#tpu.dimension_semantics<parallel>, #tpu.dimension_semantics<parallel>, #tpu.dimension_semantics<arbitrary>], iteration_bounds = array<i64: 1, 2, 1>, scalar_prefetch = 0 : i64, scratch_operands = 2 : i64, tpu.core_type = #tpu.core_type<tc>, window_params = [{transform_indices = @transform_0, window_bounds = array<i64: 8, 256>}, {transform_indices = @transform_1, window_bounds = array<i64: 1, 256>}, {transform_indices = @transform_2, window_bounds = array<i64: 256, 128>}, {transform_indices = @transform_3, window_bounds = array<i64: 256, 128>}, {transform_indices = @transform_4, window_bounds = array<i64: 1, 128>}, {transform_indices = @transform_5, window_bounds = array<i64: 1, 128>}, {transform_indices = @transform_6, window_bounds = array<i64: 8, 128>}]} {
    %c0 = arith.constant 0 : index
    %c0_0 = arith.constant 0 : index
    %0 = vector.load %arg3[%c0, %c0_0] : memref<8x256xf32, #tpu.memory_space<vmem>>, vector<8x256xf32>
    %c0_1 = arith.constant 0 : index
    %c0_2 = arith.constant 0 : index
    %1 = vector.load %arg4[%c0_1, %c0_2] : memref<1x256xf32, #tpu.memory_space<vmem>>, vector<1x256xf32>
    %2 = vector.broadcast %1 : vector<1x256xf32> to vector<8x256xf32>
    %3 = arith.mulf %0, %2 : vector<8x256xf32>
    %4 = arith.truncf %0 : vector<8x256xf32> to vector<8x256xbf16>
    %5 = arith.truncf %3 : vector<8x256xf32> to vector<8x256xbf16>
    %c0_3 = arith.constant 0 : index
    %c0_4 = arith.constant 0 : index
    %6 = vector.load %arg5[%c0_3, %c0_4] : memref<256x128xbf16, #tpu.memory_space<vmem>>, vector<256x128xbf16>
    %cst = arith.constant dense<0.000000e+00> : vector<8x128xf32>
    %7 = tpu.matmul %4, %6, %cst {dimension_numbers = #tpu.dot_dimension_numbers<[1], [0], [0], [1], [0, 0, 1, 1], [], []>} : vector<8x256xbf16>, vector<256x128xbf16>, vector<8x128xf32> -> vector<8x128xf32>
    %c0_5 = arith.constant 0 : index
    %c0_6 = arith.constant 0 : index
    %8 = vector.load %arg6[%c0_5, %c0_6] : memref<256x128xbf16, #tpu.memory_space<vmem>>, vector<256x128xbf16>
    %cst_7 = arith.constant dense<0.000000e+00> : vector<8x128xf32>
    %9 = tpu.matmul %5, %8, %cst_7 {dimension_numbers = #tpu.dot_dimension_numbers<[1], [0], [0], [1], [0, 0, 1, 1], [], []>} : vector<8x256xbf16>, vector<256x128xbf16>, vector<8x128xf32> -> vector<8x128xf32>
    %c0_i32 = arith.constant 0 : i32
    %10 = arith.cmpi eq, %arg2, %c0_i32 : i32
    %11 = arith.extui %10 : i1 to i32
    %c0_i32_8 = arith.constant 0 : i32
    %12 = arith.cmpi ne, %11, %c0_i32_8 : i32
    scf.if %12 {
      %c0_13 = arith.constant 0 : index
      %c0_14 = arith.constant 0 : index
      %19 = vector.load %arg10[%c0_13, %c0_14] : memref<8x128xf32, #tpu.memory_space<vmem>>, vector<8x128xf32>
      tpu.vector_store %arg10[%c0_13, %c0_14], %7 {strides = array<i32>} : memref<8x128xf32, #tpu.memory_space<vmem>>, vector<8x128xf32>,
      %c0_15 = arith.constant 0 : index
      %c0_16 = arith.constant 0 : index
      %20 = vector.load %arg11[%c0_15, %c0_16] : memref<8x128xf32, #tpu.memory_space<vmem>>, vector<8x128xf32>
      tpu.vector_store %arg11[%c0_15, %c0_16], %9 {strides = array<i32>} : memref<8x128xf32, #tpu.memory_space<vmem>>, vector<8x128xf32>,
    } else {
    }
    %c0_i32_9 = arith.constant 0 : i32
    %13 = arith.cmpi sgt, %arg2, %c0_i32_9 : i32
    %14 = arith.extui %13 : i1 to i32
    %c0_i32_10 = arith.constant 0 : i32
    %15 = arith.cmpi ne, %14, %c0_i32_10 : i32
    scf.if %15 {
      %c0_13 = arith.constant 0 : index
      %c0_14 = arith.constant 0 : index
      %19 = vector.load %arg10[%c0_13, %c0_14] : memref<8x128xf32, #tpu.memory_space<vmem>>, vector<8x128xf32>
      %20 = arith.addf %19, %7 : vector<8x128xf32>
      %c0_15 = arith.constant 0 : index
      %c0_16 = arith.constant 0 : index
      %21 = vector.load %arg10[%c0_15, %c0_16] : memref<8x128xf32, #tpu.memory_space<vmem>>, vector<8x128xf32>
      tpu.vector_store %arg10[%c0_15, %c0_16], %20 {strides = array<i32>} : memref<8x128xf32, #tpu.memory_space<vmem>>, vector<8x128xf32>,
      %c0_17 = arith.constant 0 : index
      %c0_18 = arith.constant 0 : index
      %22 = vector.load %arg11[%c0_17, %c0_18] : memref<8x128xf32, #tpu.memory_space<vmem>>, vector<8x128xf32>
      %23 = arith.addf %22, %9 : vector<8x128xf32>
      %c0_19 = arith.constant 0 : index
      %c0_20 = arith.constant 0 : index
      %24 = vector.load %arg11[%c0_19, %c0_20] : memref<8x128xf32, #tpu.memory_space<vmem>>, vector<8x128xf32>
      tpu.vector_store %arg11[%c0_19, %c0_20], %23 {strides = array<i32>} : memref<8x128xf32, #tpu.memory_space<vmem>>, vector<8x128xf32>,
    } else {
    }
    %c0_i32_11 = arith.constant 0 : i32
    %16 = arith.cmpi eq, %arg2, %c0_i32_11 : i32
    %17 = arith.extui %16 : i1 to i32
    %c0_i32_12 = arith.constant 0 : i32
    %18 = arith.cmpi ne, %17, %c0_i32_12 : i32
    scf.if %18 {
      %c0_13 = arith.constant 0 : index
      %c0_14 = arith.constant 0 : index
      %19 = vector.load %arg10[%c0_13, %c0_14] : memref<8x128xf32, #tpu.memory_space<vmem>>, vector<8x128xf32>
      %c0_15 = arith.constant 0 : index
      %c0_16 = arith.constant 0 : index
      %20 = vector.load %arg7[%c0_15, %c0_16] : memref<1x128xf32, #tpu.memory_space<vmem>>, vector<1x128xf32>
      %c0_17 = arith.constant 0 : index
      %c0_18 = arith.constant 0 : index
      %21 = vector.load %arg11[%c0_17, %c0_18] : memref<8x128xf32, #tpu.memory_space<vmem>>, vector<8x128xf32>
      %22 = vector.broadcast %20 : vector<1x128xf32> to vector<8x128xf32>
      %23 = arith.mulf %22, %21 : vector<8x128xf32>
      %24 = arith.addf %19, %23 : vector<8x128xf32>
      %c0_19 = arith.constant 0 : index
      %c0_20 = arith.constant 0 : index
      %25 = vector.load %arg8[%c0_19, %c0_20] : memref<1x128xf32, #tpu.memory_space<vmem>>, vector<1x128xf32>
      %26 = vector.broadcast %25 : vector<1x128xf32> to vector<8x128xf32>
      %27 = arith.addf %24, %26 : vector<8x128xf32>
      %c0_21 = arith.constant 0 : index
      %c0_22 = arith.constant 0 : index
      %28 = vector.load %arg9[%c0_21, %c0_22] : memref<8x128xf32, #tpu.memory_space<vmem>>, vector<8x128xf32>
      tpu.vector_store %arg9[%c0_21, %c0_22], %27 {strides = array<i32>} : memref<8x128xf32, #tpu.memory_space<vmem>>, vector<8x128xf32>,
    } else {
    }
    return
  }
  func.func @transform_0(%arg0: i32, %arg1: i32, %arg2: i32) -> (i32, i32) {
    %c0_i32 = arith.constant 0 : i32
    return %arg0, %arg2 : i32, i32
  }
  func.func @transform_1(%arg0: i32, %arg1: i32, %arg2: i32) -> (i32, i32) {
    %c0_i32 = arith.constant 0 : i32
    %c0_i32_0 = arith.constant 0 : i32
    return %c0_i32, %arg2 : i32, i32
  }
  func.func @transform_2(%arg0: i32, %arg1: i32, %arg2: i32) -> (i32, i32) {
    %c0_i32 = arith.constant 0 : i32
    return %arg2, %arg1 : i32, i32
  }
  func.func @transform_3(%arg0: i32, %arg1: i32, %arg2: i32) -> (i32, i32) {
    %c0_i32 = arith.constant 0 : i32
    return %arg2, %arg1 : i32, i32
  }
  func.func @transform_4(%arg0: i32, %arg1: i32, %arg2: i32) -> (i32, i32) {
    %c0_i32 = arith.constant 0 : i32
    %c0_i32_0 = arith.constant 0 : i32
    return %c0_i32, %arg1 : i32, i32
  }
  func.func @transform_5(%arg0: i32, %arg1: i32, %arg2: i32) -> (i32, i32) {
    %c0_i32 = arith.constant 0 : i32
    %c0_i32_0 = arith.constant 0 : i32
    return %c0_i32, %arg1 : i32, i32
  }
  func.func @transform_6(%arg0: i32, %arg1: i32, %arg2: i32) -> (i32, i32) {
    %c0_i32 = arith.constant 0 : i32
    return %arg0, %arg1 : i32, i32
  }
}

</mosaic_0001>

<llo_original>
// kernel: tpu_custom_call.1
$region0: #{tpu_custom_call.1}
  #allocation0 [shape = 'u32[]', space=smem, size = 0x4, offset = 0x4, fixed_abs, tag = 'smem constant byte address 0x4 - core index']
  #allocation1 [shape = 'u32[72,128]{1,0:T(1,128)}', space=vmem, size = 0x9000, scoped, tag = 'internal scratch']
  #allocation2 [shape = 'f32[8,128]{1,0:T(8,128)}', space=vmem, size = 0x1000, scoped, tag = 'scratch operand']
  #allocation3 [shape = 'f32[8,128]{1,0:T(8,128)}', space=vmem, size = 0x1000, scoped, tag = 'scratch operand']
  %s0 = inlined_call_operand.hbm [shape: f32[8,256], index: 0, kind: input, shape index: {}]
  %s1 = inlined_call_operand.hbm [shape: f32[1,256], index: 1, kind: input, shape index: {}]
  %s2 = inlined_call_operand.hbm [shape: bf16[256,256], index: 2, kind: input, shape index: {}]
  %s3 = inlined_call_operand.hbm [shape: bf16[256,256], index: 3, kind: input, shape index: {}]
  %s4 = inlined_call_operand.vmem [shape: f32[1,256], index: 4, kind: input, shape index: {}]
  %s5 = inlined_call_operand.vmem [shape: f32[1,256], index: 5, kind: input, shape index: {}]
  %s6 = inlined_call_operand.hbm [shape: f32[8,256], index: 6, kind: output, shape index: {}]
  %s7 = sld [smem:[#allocation0]]
  $region85: #{tpu_custom_call.1} parent=0
    _
  %s9 = ssub.s32 1, %s7
  %s10 = scalar_select 0, %s9, %s7
  $region1: #{tpu_custom_call.1} parent=0
    #allocation4 [shape = 'u8[8192]{0}', space=vmem, size = 0x2000, scoped, tag = 'input window, operand 0, single buffered']
    #allocation5 [shape = 's32[2]{0}', space=sflag, size = 0x8, scoped, tag = 'scoped memory for tpu_custom_call.1']
    #allocation6 [shape = 's32[2]{0}', space=sflag, size = 0x8, scoped, tag = 'scoped memory for tpu_custom_call.1']
    #allocation7 [shape = 'u8[1024]{0}', space=vmem, size = 0x400, scoped, tag = 'input window, operand 1, single buffered']
    #allocation8 [shape = 's32[1]{0}', space=sflag, size = 0x4, scoped, tag = 'scoped memory for tpu_custom_call.1']
    #allocation9 [shape = 'u8[131072]{0}', space=vmem, size = 0x20000, scoped, tag = 'input window, operand 2']
    #allocation10 [shape = 'u8[131072]{0}', space=vmem, size = 0x20000, scoped, tag = 'input window, operand 3']
    #allocation11 [shape = 'u8[8192]{0}', space=vmem, size = 0x2000, scoped, tag = 'output window, operand 0']
    %11 = vsyncpa [#allocation5], 0
    %12 = vsyncpa [#allocation8], 0
    %13 = vsyncpa [#allocation6], 0
    %s14 = scalar_lea.sflag [#allocation6], 1
    %15 = vsyncpa %s14, 0
    loop: start=0, step=1, limit=4
    $region2: #{tpu_custom_call.1} parent=1 // loop_pre_header
      _
    $region3: #{tpu_custom_call.1} parent=1 // loop_header
      %s17 = sphi 0, %s21
      %p18 = scmp.ge.s32.totalorder %s17, 4
      %s24 = sphi 0, %s43
      %s25 = sphi 0, %s39
      %s26 = sphi 0, %s35
      %s27 = sphi 0, %s24
      %s28 = sphi 0, %s25
      %s29 = sphi 0, %s26
      %s30 = sphi 0, %s27
      %s31 = sphi 0, %s28
      %s32 = sphi 0, %s29
      %s48 = sphi 0, %s50
      %s51 = sphi 0, %s48
      %s52 = sphi 0, %s51
      %s68 = sphi 0, %s52
      %s74 = sphi 0, %s76
      %s77 = sphi 0, %s74
      %s78 = sphi 0, %s77
      %s94 = sphi 0, %s78
      %s102 = sphi 0, %s104
      %s105 = sphi 0, %s102
      %s106 = sphi 0, %s105
      %s122 = sphi 0, %s106
      %s130 = sphi 0, %s132
      %s133 = sphi 0, %s130
      %s134 = sphi 0, %s133
      %s150 = sphi 0, %s134
      %s156 = sphi 0, %s158
      %s159 = sphi 0, %s156
      %s160 = sphi 0, %s159
      %s176 = sphi 0, %s160
      %s182 = sphi 0, %s184
      %s185 = sphi 0, %s182
      %s186 = sphi 0, %s185
      %s202 = sphi 0, %s186
      %s210 = sphi 0, %s212
      %s213 = sphi 0, %s210
      %s214 = sphi 0, %s213
      %s230 = sphi 0, %s214
    $region4: #{tpu_custom_call.1} parent=1 // loop_header_branch
      %20 = sbr.rel (%p18) target = $region8
    $region5: #{tpu_custom_call.1} parent=1 // loop_body
      %s22 = ssub.s32 %s17, 1
      %s23 = ssub.s32 %s17, 2
      %s33 = sadd.s32 1, %s26
      %p34 = scmp.ge.s32.totalorder %s33, 1
      %s35 = scalar_select %p34, 0, %s33
      %s36 = sadd.s32 1, %s25
      %s37 = scalar_select %p34, %s36, %s25
      %p38 = scmp.ge.s32.totalorder %s37, 2
      %s39 = scalar_select %p38, 0, %s37
      %s40 = sadd.s32 1, %s24
      %s41 = scalar_select %p38, %s40, %s24
      %p42 = scmp.ge.s32.totalorder %s41, 1
      %s43 = scalar_select %p42, 0, %s41
      %s44 = ssub.s32 %s24, %s43
      %s45 = ssub.s32 %s26, %s35
      %s46 = sor.u32 %s44, %s45
      %p47 = scmp.eq.s32.totalorder %s46, 0
      %s49 = sadd.s32 %s48, 1
      %s50 = scalar_select %p47, %s48, %s49
      %p53 = pneg %p47
      %p54 = scmp.eq.s32.totalorder %s17, 1
      %p55 = por %p53, %p54
      %p56 = scmp.ne.s32.totalorder %s48, %s51
      %p57 = scmp.eq.s32.totalorder %s17, 0
      %p58 = por %p56, %p57
      %p59 = scmp.ne.s32.totalorder %s48, %s51
      %p60 = scmp.eq.s32.totalorder %s22, 1
      %p61 = por %p59, %p60
      %p62 = scmp.ne.s32.totalorder %s51, %s52
      %p63 = scmp.eq.s32.totalorder %s22, 0
      %p64 = por %p62, %p63
      %p65 = scmp.ne.s32.totalorder %s51, %s52
      %p66 = scmp.eq.s32.totalorder %s23, 1
      %p67 = por %p65, %p66
      %p69 = scmp.ne.s32.totalorder %s52, %s68
      %p70 = scmp.eq.s32.totalorder %s23, 0
      %p71 = por %p69, %p70
      %s72 = ssub.s32 %s26, %s35
      %p73 = scmp.eq.s32.totalorder %s72, 0
      %s75 = sadd.s32 %s74, 1
      %s76 = scalar_select %p73, %s74, %s75
      %p79 = pneg %p73
      %p80 = scmp.eq.s32.totalorder %s17, 1
      %p81 = por %p79, %p80
      %p82 = scmp.ne.s32.totalorder %s74, %s77
      %p83 = scmp.eq.s32.totalorder %s17, 0
      %p84 = por %p82, %p83
      %p85 = scmp.ne.s32.totalorder %s74, %s77
      %p86 = scmp.eq.s32.totalorder %s22, 1
      %p87 = por %p85, %p86
      %p88 = scmp.ne.s32.totalorder %s77, %s78
      %p89 = scmp.eq.s32.totalorder %s22, 0
      %p90 = por %p88, %p89
      %p91 = scmp.ne.s32.totalorder %s77, %s78
      %p92 = scmp.eq.s32.totalorder %s23, 1
      %p93 = por %p91, %p92
      %p95 = scmp.ne.s32.totalorder %s78, %s94
      %p96 = scmp.eq.s32.totalorder %s23, 0
      %p97 = por %p95, %p96
      %s98 = ssub.s32 %s26, %s35
      %s99 = ssub.s32 %s25, %s39
      %s100 = sor.u32 %s98, %s99
      %p101 = scmp.eq.s32.totalorder %s100, 0
      %s103 = sadd.s32 %s102, 1
      %s104 = scalar_select %p101, %s102, %s103
      %p107 = pneg %p101
      %p108 = scmp.eq.s32.totalorder %s17, 1
      %p109 = por %p107, %p108
      %p110 = scmp.ne.s32.totalorder %s102, %s105
      %p111 = scmp.eq.s32.totalorder %s17, 0
      %p112 = por %p110, %p111
      %p113 = scmp.ne.s32.totalorder %s102, %s105
      %p114 = scmp.eq.s32.totalorder %s22, 1
      %p115 = por %p113, %p114
      %p116 = scmp.ne.s32.totalorder %s105, %s106
      %p117 = scmp.eq.s32.totalorder %s22, 0
      %p118 = por %p116, %p117
      %p119 = scmp.ne.s32.totalorder %s105, %s106
      %p120 = scmp.eq.s32.totalorder %s23, 1
      %p121 = por %p119, %p120
      %p123 = scmp.ne.s32.totalorder %s106, %s122
      %p124 = scmp.eq.s32.totalorder %s23, 0
      %p125 = por %p123, %p124
      %s126 = ssub.s32 %s26, %s35
      %s127 = ssub.s32 %s25, %s39
      %s128 = sor.u32 %s126, %s127
      %p129 = scmp.eq.s32.totalorder %s128, 0
      %s131 = sadd.s32 %s130, 1
      %s132 = scalar_select %p129, %s130, %s131
      %p135 = pneg %p129
      %p136 = scmp.eq.s32.totalorder %s17, 1
      %p137 = por %p135, %p136
      %p138 = scmp.ne.s32.totalorder %s130, %s133
      %p139 = scmp.eq.s32.totalorder %s17, 0
      %p140 = por %p138, %p139
      %p141 = scmp.ne.s32.totalorder %s130, %s133
      %p142 = scmp.eq.s32.totalorder %s22, 1
      %p143 = por %p141, %p142
      %p144 = scmp.ne.s32.totalorder %s133, %s134
      %p145 = scmp.eq.s32.totalorder %s22, 0
      %p146 = por %p144, %p145
      %p147 = scmp.ne.s32.totalorder %s133, %s134
      %p148 = scmp.eq.s32.totalorder %s23, 1
      %p149 = por %p147, %p148
      %p151 = scmp.ne.s32.totalorder %s134, %s150
      %p152 = scmp.eq.s32.totalorder %s23, 0
      %p153 = por %p151, %p152
      %s154 = ssub.s32 %s25, %s39
      %p155 = scmp.eq.s32.totalorder %s154, 0
      %s157 = sadd.s32 %s156, 1
      %s158 = scalar_select %p155, %s156, %s157
      %p161 = pneg %p155
      %p162 = scmp.eq.s32.totalorder %s17, 1
      %p163 = por %p161, %p162
      %p164 = scmp.ne.s32.totalorder %s156, %s159
      %p165 = scmp.eq.s32.totalorder %s17, 0
      %p166 = por %p164, %p165
      %p167 = scmp.ne.s32.totalorder %s156, %s159
      %p168 = scmp.eq.s32.totalorder %s22, 1
      %p169 = por %p167, %p168
      %p170 = scmp.ne.s32.totalorder %s159, %s160
      %p171 = scmp.eq.s32.totalorder %s22, 0
      %p172 = por %p170, %p171
      %p173 = scmp.ne.s32.totalorder %s159, %s160
      %p174 = scmp.eq.s32.totalorder %s23, 1
      %p175 = por %p173, %p174
      %p177 = scmp.ne.s32.totalorder %s160, %s176
      %p178 = scmp.eq.s32.totalorder %s23, 0
      %p179 = por %p177, %p178
      %s180 = ssub.s32 %s25, %s39
      %p181 = scmp.eq.s32.totalorder %s180, 0
      %s183 = sadd.s32 %s182, 1
      %s184 = scalar_select %p181, %s182, %s183
      %p187 = pneg %p181
      %p188 = scmp.eq.s32.totalorder %s17, 1
      %p189 = por %p187, %p188
      %p190 = scmp.ne.s32.totalorder %s182, %s185
      %p191 = scmp.eq.s32.totalorder %s17, 0
      %p192 = por %p190, %p191
      %p193 = scmp.ne.s32.totalorder %s182, %s185
      %p194 = scmp.eq.s32.totalorder %s22, 1
      %p195 = por %p193, %p194
      %p196 = scmp.ne.s32.totalorder %s185, %s186
      %p197 = scmp.eq.s32.totalorder %s22, 0
      %p198 = por %p196, %p197
      %p199 = scmp.ne.s32.totalorder %s185, %s186
      %p200 = scmp.eq.s32.totalorder %s23, 1
      %p201 = por %p199, %p200
      %p203 = scmp.ne.s32.totalorder %s186, %s202
      %p204 = scmp.eq.s32.totalorder %s23, 0
      %p205 = por %p203, %p204
      %s206 = ssub.s32 %s24, %s43
      %s207 = ssub.s32 %s25, %s39
      %s208 = sor.u32 %s206, %s207
      %p209 = scmp.eq.s32.totalorder %s208, 0
      %s211 = sadd.s32 %s210, 1
      %s212 = scalar_select %p209, %s210, %s211
      %p215 = pneg %p209
      %p216 = scmp.eq.s32.totalorder %s17, 1
      %p217 = por %p215, %p216
      %p218 = scmp.ne.s32.totalorder %s210, %s213
      %p219 = scmp.eq.s32.totalorder %s17, 0
      %p220 = por %p218, %p219
      %p221 = scmp.ne.s32.totalorder %s210, %s213
      %p222 = scmp.eq.s32.totalorder %s22, 1
      %p223 = por %p221, %p222
      %p224 = scmp.ne.s32.totalorder %s213, %s214
      %p225 = scmp.eq.s32.totalorder %s22, 0
      %p226 = por %p224, %p225
      %p227 = scmp.ne.s32.totalorder %s213, %s214
      %p228 = scmp.eq.s32.totalorder %s23, 1
      %p229 = por %p227, %p228
      %p231 = scmp.ne.s32.totalorder %s214, %s230
      %p232 = scmp.eq.s32.totalorder %s23, 0
      %p233 = por %p231, %p232
      %p234 = scmp.le.s32.totalorder 1, %s17
      %p235 = scmp.lt.s32.totalorder %s17, 3
      %p236 = pnand %p234, %p235
      %p237 = pneg %p236
      // Predicated region
      $region9: #{tpu_custom_call.1} parent=5 // pred_check
        _
      $region10: #{tpu_custom_call.1} parent=5 // pred_check_branch
        %239 = sbr.rel (%p236) target = $region12
      $region11: #{tpu_custom_call.1} parent=5 // pred_region
        %s240 = ssub.s32 %s17, 1
        // Predicated region
        $region13: #{tpu_custom_call.1} parent=11 // pred_check
          %p241 = pneg %p64
        $region14: #{tpu_custom_call.1} parent=11 // pred_check_branch
          %243 = sbr.rel (%p241) target = $region16
        $region15: #{tpu_custom_call.1} parent=11 // pred_region
          %s244 = smul.u32 2, %s29
          %246 = vsyncadd [#allocation5], 0
          %s247 = smul.addr %s27, 2
          %s248 = sadd.s32 %s244, %s247
          %s249 = smul.addr %s248, 8
          %s250 = scalar_lea.hbm %s0, %s249
          %s252 = sshll.u32 %s250, 4
          %s253 = int_to_ptr.hbm [resolvable:$true] %s252
          %s254 = sshll.u32 [#allocation4], 4
          %s255 = int_to_ptr.vmem [resolvable:$true] %s254
          %257 = dma.hbm_to_vmem [thread:$0]  %s253, 256, %s255, [#allocation5]
        $region16: #{tpu_custom_call.1} parent=11 // pred_fallthru
          _
        // Predicated region
        $region17: #{tpu_custom_call.1} parent=11 // pred_check
          %p258 = pneg %p90
        $region18: #{tpu_custom_call.1} parent=11 // pred_check_branch
          %260 = sbr.rel (%p258) target = $region20
        $region19: #{tpu_custom_call.1} parent=11 // pred_region
          %s261 = smul.u32 2, %s29
          %263 = vsyncadd [#allocation8], 0
          %s264 = scalar_lea.hbm %s1, %s261
          %s266 = sshll.u32 %s264, 4
          %s267 = int_to_ptr.hbm [resolvable:$true] %s266
          %s268 = sshll.u32 [#allocation7], 4
          %s269 = int_to_ptr.vmem [resolvable:$true] %s268
          %271 = dma.hbm_to_vmem [thread:$0]  %s267, 32, %s269, [#allocation8]
        $region20: #{tpu_custom_call.1} parent=11 // pred_fallthru
          _
      $region12: #{tpu_custom_call.1} parent=5 // pred_fallthru
        _
      %p272 = scmp.lt.s32.totalorder %s17, 2
      // Predicated region
      $region21: #{tpu_custom_call.1} parent=5 // pred_check
        %p273 = pneg %p272
      $region22: #{tpu_custom_call.1} parent=5 // pred_check_branch
        %275 = sbr.rel (%p273) target = $region24
      $region23: #{tpu_custom_call.1} parent=5 // pred_region
        // Predicated region
        $region25: #{tpu_custom_call.1} parent=23 // pred_check
          %p276 = pneg %p112
        $region26: #{tpu_custom_call.1} parent=23 // pred_check_branch
          %278 = sbr.rel (%p276) target = $region28
        $region27: #{tpu_custom_call.1} parent=23 // pred_region
          %s279 = sand.u32 %s17, 1
          %s280 = scalar_lea.sflag [#allocation5], %s279
          %s281 = sand.u32 %s102, 1
          %s282 = smul.addr %s281, 128
          %s283 = scalar_lea.vmem [#allocation9], %s282
          %s284 = smul.u32 32, %s26
          %286 = vsyncadd %s280, 0
          %s287 = smul.addr %s284, 2
          %s288 = sadd.s32 %s25, %s287
          %s289 = smul.addr %s288, 4
          %s290 = scalar_lea.hbm %s2, %s289
          %s291 = sshll.u32 %s290, 4
          %s292 = int_to_ptr.hbm [resolvable:$true] %s291
          %s293 = sshll.u32 %s283, 4
          %s294 = int_to_ptr.vmem [resolvable:$true] %s293
          %299 = dma.hbm_to_vmem [thread:$0]  %s292, 2048, %s294, %s280, 128, 64, 4
        $region28: #{tpu_custom_call.1} parent=23 // pred_fallthru
          _
        // Predicated region
        $region29: #{tpu_custom_call.1} parent=23 // pred_check
          %p300 = pneg %p140
        $region30: #{tpu_custom_call.1} parent=23 // pred_check_branch
          %302 = sbr.rel (%p300) target = $region32
        $region31: #{tpu_custom_call.1} parent=23 // pred_region
          %s303 = sand.u32 %s17, 1
          %s304 = scalar_lea.sflag [#allocation5], %s303
          %s305 = sand.u32 %s130, 1
          %s306 = smul.addr %s305, 128
          %s307 = scalar_lea.vmem [#allocation10], %s306
          %s308 = smul.u32 32, %s26
          %310 = vsyncadd %s304, 0
          %s311 = smul.addr %s308, 2
          %s312 = sadd.s32 %s25, %s311
          %s313 = smul.addr %s312, 4
          %s314 = scalar_lea.hbm %s3, %s313
          %s315 = sshll.u32 %s314, 4
          %s316 = int_to_ptr.hbm [resolvable:$true] %s315
          %s317 = sshll.u32 %s307, 4
          %s318 = int_to_ptr.vmem [resolvable:$true] %s317
          %323 = dma.hbm_to_vmem [thread:$0]  %s316, 2048, %s318, %s304, 128, 64, 4
        $region32: #{tpu_custom_call.1} parent=23 // pred_fallthru
          _
        // Predicated region
        $region33: #{tpu_custom_call.1} parent=23 // pred_check
          %p324 = pneg %p166
        $region34: #{tpu_custom_call.1} parent=23 // pred_check_branch
          %326 = sbr.rel (%p324) target = $region36
        $region35: #{tpu_custom_call.1} parent=23 // pred_region
          %p327 = scmp.lt.s32.totalorder %s25, 1
          %s328 = scalar_select %p327, %s25, 1
          %s329 = scalar_lea.vmem %s4, %s328
        $region36: #{tpu_custom_call.1} parent=23 // pred_fallthru
          _
        // Predicated region
        $region37: #{tpu_custom_call.1} parent=23 // pred_check
          %p330 = pneg %p192
        $region38: #{tpu_custom_call.1} parent=23 // pred_check_branch
          %332 = sbr.rel (%p330) target = $region40
        $region39: #{tpu_custom_call.1} parent=23 // pred_region
          %p333 = scmp.lt.s32.totalorder %s25, 1
          %s334 = scalar_select %p333, %s25, 1
          %s335 = scalar_lea.vmem %s5, %s334
        $region40: #{tpu_custom_call.1} parent=23 // pred_fallthru
          _
      $region24: #{tpu_custom_call.1} parent=5 // pred_fallthru
        _
      %p336 = scmp.le.s32.totalorder 1, %s17
      %p337 = scmp.lt.s32.totalorder %s17, 3
      %p338 = pnand %p336, %p337
      %p339 = pneg %p338
      // Predicated region
      $region41: #{tpu_custom_call.1} parent=5 // pred_check
        _
      $region42: #{tpu_custom_call.1} parent=5 // pred_check_branch
        %341 = sbr.rel (%p338) target = $region44
      $region43: #{tpu_custom_call.1} parent=5 // pred_region
        %s342 = ssub.s32 %s17, 1
        // Predicated region
        $region45: #{tpu_custom_call.1} parent=43 // pred_check
          %p343 = pneg %p64
        $region46: #{tpu_custom_call.1} parent=43 // pred_check_branch
          %345 = sbr.rel (%p343) target = $region48
        $region47: #{tpu_custom_call.1} parent=43 // pred_region
          %347 = dma.done [#allocation5], 256
        $region48: #{tpu_custom_call.1} parent=43 // pred_fallthru
          _
        // Predicated region
        $region49: #{tpu_custom_call.1} parent=43 // pred_check
          %p348 = pneg %p90
        $region50: #{tpu_custom_call.1} parent=43 // pred_check_branch
          %350 = sbr.rel (%p348) target = $region52
        $region51: #{tpu_custom_call.1} parent=43 // pred_region
          %352 = dma.done [#allocation8], 32
        $region52: #{tpu_custom_call.1} parent=43 // pred_fallthru
          _
        %s353 = sand.u32 %s22, 1
        %s354 = scalar_lea.sflag [#allocation5], %s353
        %s355 = sand.u32 %s105, 1
        %s356 = smul.addr %s355, 128
        %s357 = scalar_lea.vmem [#allocation9], %s356
        // Predicated region
        $region53: #{tpu_custom_call.1} parent=43 // pred_check
          %p358 = pneg %p118
        $region54: #{tpu_custom_call.1} parent=43 // pred_check_branch
          %360 = sbr.rel (%p358) target = $region56
        $region55: #{tpu_custom_call.1} parent=43 // pred_region
          %362 = dma.done %s354, 2048
        $region56: #{tpu_custom_call.1} parent=43 // pred_fallthru
          _
        %s363 = sand.u32 %s22, 1
        %s364 = scalar_lea.sflag [#allocation5], %s363
        %s365 = sand.u32 %s133, 1
        %s366 = smul.addr %s365, 128
        %s367 = scalar_lea.vmem [#allocation10], %s366
        // Predicated region
        $region57: #{tpu_custom_call.1} parent=43 // pred_check
          %p368 = pneg %p146
        $region58: #{tpu_custom_call.1} parent=43 // pred_check_branch
          %370 = sbr.rel (%p368) target = $region60
        $region59: #{tpu_custom_call.1} parent=43 // pred_region
          %372 = dma.done %s364, 2048
        $region60: #{tpu_custom_call.1} parent=43 // pred_fallthru
          _
        %p373 = pneg %p64
        %p374 = pneg %p61
        %p375 = pneg %p90
        %p376 = pneg %p87
        %s377 = sand.u32 %s22, 1
        %s378 = scalar_lea.sflag [#allocation5], %s377
        %s379 = sand.u32 %s105, 1
        %s380 = smul.addr %s379, 128
        %s381 = scalar_lea.vmem [#allocation9], %s380
        %p382 = pneg %p118
        %p383 = pneg %p115
        %s384 = sand.u32 %s22, 1
        %s385 = scalar_lea.sflag [#allocation5], %s384
        %s386 = sand.u32 %s133, 1
        %s387 = smul.addr %s386, 128
        %s388 = scalar_lea.vmem [#allocation10], %s387
        %p389 = pneg %p146
        %p390 = pneg %p143
        %p391 = scmp.lt.s32.totalorder %s28, 1
        %s392 = scalar_select %p391, %s28, 1
        %s393 = scalar_lea.vmem %s4, %s392
        %p394 = pneg %p172
        %p395 = pneg %p169
        %p396 = scmp.lt.s32.totalorder %s28, 1
        %s397 = scalar_select %p396, %s28, 1
        %s398 = scalar_lea.vmem %s5, %s397
        %p399 = pneg %p198
        %p400 = pneg %p195
        %p401 = pneg %p226
        %p402 = pneg %p223
        %s403 = sand.u32 %s213, 1
        %s404 = scalar_lea.sflag [#allocation6], %s403
        %s405 = sand.u32 %s213, 1
        %s406 = smul.addr %s405, 8
        %s407 = scalar_lea.vmem [#allocation11], %s406
        %s408 = smul.u32 2, %s29
        %s409 = smul.u32 2, %s29
        %s410 = smul.u32 32, %s29
        %s411 = smul.u32 32, %s29
        %p412 = scmp.lt.s32.totalorder %s28, 1
        %s413 = scalar_select %p412, %s28, 1
        %s414 = scalar_lea.vmem %s4, %s413
        %p415 = scmp.lt.s32.totalorder %s28, 1
        %s416 = scalar_select %p415, %s28, 1
        %s417 = scalar_lea.vmem %s5, %s416
        %v418 = vld [vmem:[#allocation4] sm:$0xff]
        %v419 = vld [vmem:[#allocation4 + $0x8] sm:$0xff]
        %v420 = vld [vmem:[#allocation7] sm:$0x3]
        %v422 = vperm.slane %v420, 0
        %v423 = vperm.slane %v420, 1
        %v426 = vmul.f32 %v418, %v422
        %v427 = vmul.f32 %v419, %v423
        %v428 = vpack.c.bf16 %v418, %v418
        %v429 = vpack.c.bf16 %v419, %v419
        %v430 = vpack.c.bf16 %v426, %v426
        %v431 = vpack.c.bf16 %v427, %v427
        %v432 = vld [vmem:[%s357] sm:$0xf]
        %v433 = vld [vmem:[%s357 + $0x4] sm:$0xf]
        %v434 = vld [vmem:[%s357 + $0x8] sm:$0xf]
        %v435 = vld [vmem:[%s357 + $0xc] sm:$0xf]
        %v436 = vld [vmem:[%s357 + $0x10] sm:$0xf]
        %v437 = vld [vmem:[%s357 + $0x14] sm:$0xf]
        %v438 = vld [vmem:[%s357 + $0x18] sm:$0xf]
        %v439 = vld [vmem:[%s357 + $0x1c] sm:$0xf]
        %v440 = vld [vmem:[%s357 + $0x20] sm:$0xf]
        %v441 = vld [vmem:[%s357 + $0x24] sm:$0xf]
        %v442 = vld [vmem:[%s357 + $0x28] sm:$0xf]
        %v443 = vld [vmem:[%s357 + $0x2c] sm:$0xf]
        %v444 = vld [vmem:[%s357 + $0x30] sm:$0xf]
        %v445 = vld [vmem:[%s357 + $0x34] sm:$0xf]
        %v446 = vld [vmem:[%s357 + $0x38] sm:$0xf]
        %v447 = vld [vmem:[%s357 + $0x3c] sm:$0xf]
        %v448 = vld [vmem:[%s357 + $0x40] sm:$0xf]
        %v449 = vld [vmem:[%s357 + $0x44] sm:$0xf]
        %v450 = vld [vmem:[%s357 + $0x48] sm:$0xf]
        %v451 = vld [vmem:[%s357 + $0x4c] sm:$0xf]
        %v452 = vld [vmem:[%s357 + $0x50] sm:$0xf]
        %v453 = vld [vmem:[%s357 + $0x54] sm:$0xf]
        %v454 = vld [vmem:[%s357 + $0x58] sm:$0xf]
        %v455 = vld [vmem:[%s357 + $0x5c] sm:$0xf]
        %v456 = vld [vmem:[%s357 + $0x60] sm:$0xf]
        %v457 = vld [vmem:[%s357 + $0x64] sm:$0xf]
        %v458 = vld [vmem:[%s357 + $0x68] sm:$0xf]
        %v459 = vld [vmem:[%s357 + $0x6c] sm:$0xf]
        %v460 = vld [vmem:[%s357 + $0x70] sm:$0xf]
        %v461 = vld [vmem:[%s357 + $0x74] sm:$0xf]
        %v462 = vld [vmem:[%s357 + $0x78] sm:$0xf]
        %v463 = vld [vmem:[%s357 + $0x7c] sm:$0xf]
        %v496 = vunpack.c.l.b16 %v432
        %v497 = vunpack.c.l.b16 %v433
        %v498 = vunpack.c.l.b16 %v434
        %v499 = vunpack.c.l.b16 %v435
        %v500 = vunpack.c.l.b16 %v436
        %v501 = vunpack.c.l.b16 %v437
        %v502 = vunpack.c.l.b16 %v438
        %v503 = vunpack.c.l.b16 %v439
        %v504 = vunpack.c.l.b16 %v440
        %v505 = vunpack.c.l.b16 %v441
        %v506 = vunpack.c.l.b16 %v442
        %v507 = vunpack.c.l.b16 %v443
        %v508 = vunpack.c.l.b16 %v444
        %v509 = vunpack.c.l.b16 %v445
        %v510 = vunpack.c.l.b16 %v446
        %v511 = vunpack.c.l.b16 %v447
        %v512 = vunpack.c.l.b16 %v448
        %v513 = vunpack.c.l.b16 %v449
        %v514 = vunpack.c.l.b16 %v450
        %v515 = vunpack.c.l.b16 %v451
        %v516 = vunpack.c.l.b16 %v452
        %v517 = vunpack.c.l.b16 %v453
        %v518 = vunpack.c.l.b16 %v454
        %v519 = vunpack.c.l.b16 %v455
        %v520 = vunpack.c.l.b16 %v456
        %v521 = vunpack.c.l.b16 %v457
        %v522 = vunpack.c.l.b16 %v458
        %v523 = vunpack.c.l.b16 %v459
        %v524 = vunpack.c.l.b16 %v460
        %v525 = vunpack.c.l.b16 %v461
        %v526 = vunpack.c.l.b16 %v462
        %v527 = vunpack.c.l.b16 %v463
        %v528 = vpack.c.b16 %v497, %v496
        %v529 = vpack.c.b16 %v499, %v498
        %v530 = vpack.c.b16 %v501, %v500
        %v531 = vpack.c.b16 %v503, %v502
        %v532 = vpack.c.b16 %v505, %v504
        %v533 = vpack.c.b16 %v507, %v506
        %v534 = vpack.c.b16 %v509, %v508
        %v535 = vpack.c.b16 %v511, %v510
        %v536 = vpack.c.b16 %v513, %v512
        %v537 = vpack.c.b16 %v515, %v514
        %v538 = vpack.c.b16 %v517, %v516
        %v539 = vpack.c.b16 %v519, %v518
        %v540 = vpack.c.b16 %v521, %v520
        %v541 = vpack.c.b16 %v523, %v522
        %v542 = vpack.c.b16 %v525, %v524
        %v543 = vpack.c.b16 %v527, %v526
        %560 = vmatpush.bf16.msra.mxu0 %v535
        %561 = vmatpush.bf16.msra.mxu0 %v534
        %562 = vmatpush.bf16.msra.mxu0 %v533
        %563 = vmatpush.bf16.msra.mxu0 %v532
        %564 = vmatpush.bf16.msra.mxu0 %v531
        %565 = vmatpush.bf16.msra.mxu0 %v530
        %566 = vmatpush.bf16.msra.mxu0 %v529
        %567 = vmatpush.bf16.msra.mxu0 %v528
        %568 = vmatmul.bf16.gmra.mxu0 %v428
        %v569 = vpop.f32.mrf.mxu0
        %v570 = vadd.f32 0.0, %v569
        %v571 = vpop.f32.mrf.mxu0
        %572 = vdwg.mxu0
        %573 = vmatpush.bf16.msra.mxu0 %v543
        %574 = vmatpush.bf16.msra.mxu0 %v542
        %575 = vmatpush.bf16.msra.mxu0 %v541
        %576 = vmatpush.bf16.msra.mxu0 %v540
        %577 = vmatpush.bf16.msra.mxu0 %v539
        %578 = vmatpush.bf16.msra.mxu0 %v538
        %579 = vmatpush.bf16.msra.mxu0 %v537
        %580 = vmatpush.bf16.msra.mxu0 %v536
        %581 = vmatmul.bf16.gmra.mxu0 %v429
        %v582 = vpop.f32.mrf.mxu0
        %v583 = vadd.f32 %v570, %v582
        %v584 = vpop.f32.mrf.mxu0
        %585 = vdwg.mxu0
        %v586 = vld [vmem:[%s367] sm:$0xf]
        %v587 = vld [vmem:[%s367 + $0x4] sm:$0xf]
        %v588 = vld [vmem:[%s367 + $0x8] sm:$0xf]
        %v589 = vld [vmem:[%s367 + $0xc] sm:$0xf]
        %v590 = vld [vmem:[%s367 + $0x10] sm:$0xf]
        %v591 = vld [vmem:[%s367 + $0x14] sm:$0xf]
        %v592 = vld [vmem:[%s367 + $0x18] sm:$0xf]
        %v593 = vld [vmem:[%s367 + $0x1c] sm:$0xf]
        %v594 = vld [vmem:[%s367 + $0x20] sm:$0xf]
        %v595 = vld [vmem:[%s367 + $0x24] sm:$0xf]
        %v596 = vld [vmem:[%s367 + $0x28] sm:$0xf]
        %v597 = vld [vmem:[%s367 + $0x2c] sm:$0xf]
        %v598 = vld [vmem:[%s367 + $0x30] sm:$0xf]
        %v599 = vld [vmem:[%s367 + $0x34] sm:$0xf]
        %v600 = vld [vmem:[%s367 + $0x38] sm:$0xf]
        %v601 = vld [vmem:[%s367 + $0x3c] sm:$0xf]
        %v602 = vld [vmem:[%s367 + $0x40] sm:$0xf]
        %v603 = vld [vmem:[%s367 + $0x44] sm:$0xf]
        %v604 = vld [vmem:[%s367 + $0x48] sm:$0xf]
        %v605 = vld [vmem:[%s367 + $0x4c] sm:$0xf]
        %v606 = vld [vmem:[%s367 + $0x50] sm:$0xf]
        %v607 = vld [vmem:[%s367 + $0x54] sm:$0xf]
        %v608 = vld [vmem:[%s367 + $0x58] sm:$0xf]
        %v609 = vld [vmem:[%s367 + $0x5c] sm:$0xf]
        %v610 = vld [vmem:[%s367 + $0x60] sm:$0xf]
        %v611 = vld [vmem:[%s367 + $0x64] sm:$0xf]
        %v612 = vld [vmem:[%s367 + $0x68] sm:$0xf]
        %v613 = vld [vmem:[%s367 + $0x6c] sm:$0xf]
        %v614 = vld [vmem:[%s367 + $0x70] sm:$0xf]
        %v615 = vld [vmem:[%s367 + $0x74] sm:$0xf]
        %v616 = vld [vmem:[%s367 + $0x78] sm:$0xf]
        %v617 = vld [vmem:[%s367 + $0x7c] sm:$0xf]
        %v650 = vunpack.c.l.b16 %v586
        %v651 = vunpack.c.l.b16 %v587
        %v652 = vunpack.c.l.b16 %v588
        %v653 = vunpack.c.l.b16 %v589
        %v654 = vunpack.c.l.b16 %v590
        %v655 = vunpack.c.l.b16 %v591
        %v656 = vunpack.c.l.b16 %v592
        %v657 = vunpack.c.l.b16 %v593
        %v658 = vunpack.c.l.b16 %v594
        %v659 = vunpack.c.l.b16 %v595
        %v660 = vunpack.c.l.b16 %v596
        %v661 = vunpack.c.l.b16 %v597
        %v662 = vunpack.c.l.b16 %v598
        %v663 = vunpack.c.l.b16 %v599
        %v664 = vunpack.c.l.b16 %v600
        %v665 = vunpack.c.l.b16 %v601
        %v666 = vunpack.c.l.b16 %v602
        %v667 = vunpack.c.l.b16 %v603
        %v668 = vunpack.c.l.b16 %v604
        %v669 = vunpack.c.l.b16 %v605
        %v670 = vunpack.c.l.b16 %v606
        %v671 = vunpack.c.l.b16 %v607
        %v672 = vunpack.c.l.b16 %v608
        %v673 = vunpack.c.l.b16 %v609
        %v674 = vunpack.c.l.b16 %v610
        %v675 = vunpack.c.l.b16 %v611
        %v676 = vunpack.c.l.b16 %v612
        %v677 = vunpack.c.l.b16 %v613
        %v678 = vunpack.c.l.b16 %v614
        %v679 = vunpack.c.l.b16 %v615
        %v680 = vunpack.c.l.b16 %v616
        %v681 = vunpack.c.l.b16 %v617
        %v682 = vpack.c.b16 %v651, %v650
        %v683 = vpack.c.b16 %v653, %v652
        %v684 = vpack.c.b16 %v655, %v654
        %v685 = vpack.c.b16 %v657, %v656
        %v686 = vpack.c.b16 %v659, %v658
        %v687 = vpack.c.b16 %v661, %v660
        %v688 = vpack.c.b16 %v663, %v662
        %v689 = vpack.c.b16 %v665, %v664
        %v690 = vpack.c.b16 %v667, %v666
        %v691 = vpack.c.b16 %v669, %v668
        %v692 = vpack.c.b16 %v671, %v670
        %v693 = vpack.c.b16 %v673, %v672
        %v694 = vpack.c.b16 %v675, %v674
        %v695 = vpack.c.b16 %v677, %v676
        %v696 = vpack.c.b16 %v679, %v678
        %v697 = vpack.c.b16 %v681, %v680
        %714 = vmatpush.bf16.msra.mxu0 %v689
        %715 = vmatpush.bf16.msra.mxu0 %v688
        %716 = vmatpush.bf16.msra.mxu0 %v687
        %717 = vmatpush.bf16.msra.mxu0 %v686
        %718 = vmatpush.bf16.msra.mxu0 %v685
        %719 = vmatpush.bf16.msra.mxu0 %v684
        %720 = vmatpush.bf16.msra.mxu0 %v683
        %721 = vmatpush.bf16.msra.mxu0 %v682
        %722 = vmatmul.bf16.gmra.mxu0 %v430
        %v723 = vpop.f32.mrf.mxu0
        %v724 = vadd.f32 0.0, %v723
        %v725 = vpop.f32.mrf.mxu0
        %726 = vdwg.mxu0
        %727 = vmatpush.bf16.msra.mxu0 %v697
        %728 = vmatpush.bf16.msra.mxu0 %v696
        %729 = vmatpush.bf16.msra.mxu0 %v695
        %730 = vmatpush.bf16.msra.mxu0 %v694
        %731 = vmatpush.bf16.msra.mxu0 %v693
        %732 = vmatpush.bf16.msra.mxu0 %v692
        %733 = vmatpush.bf16.msra.mxu0 %v691
        %734 = vmatpush.bf16.msra.mxu0 %v690
        %735 = vmatmul.bf16.gmra.mxu0 %v431
        %v736 = vpop.f32.mrf.mxu0
        %v737 = vadd.f32 %v724, %v736
        %v738 = vpop.f32.mrf.mxu0
        %739 = vdwg.mxu0
        %p740 = scmp.eq.s32.totalorder %s29, 0
        // Predicated region
        $region61: #{tpu_custom_call.1} parent=43 // pred_check
          %p741 = pneg %p740
        $region62: #{tpu_custom_call.1} parent=43 // pred_check_branch
          %743 = sbr.rel (%p741) target = $region64
        $region63: #{tpu_custom_call.1} parent=43 // pred_region
          %744 = vst [vmem:[#allocation2] sm:$0xff] %v583
          %745 = vst [vmem:[#allocation3] sm:$0xff] %v737
        $region64: #{tpu_custom_call.1} parent=43 // pred_fallthru
          _
        %p746 = scmp.gt.s32.totalorder %s29, 0
        // Predicated region
        $region65: #{tpu_custom_call.1} parent=43 // pred_check
          %p747 = pneg %p746
        $region66: #{tpu_custom_call.1} parent=43 // pred_check_branch
          %749 = sbr.rel (%p747) target = $region68
        $region67: #{tpu_custom_call.1} parent=43 // pred_region
          %v750 = vld [vmem:[#allocation2] sm:$0xff]
          %v751 = vadd.f32 %v750, %v583
          %752 = vst [vmem:[#allocation2] sm:$0xff] %v751
          %v753 = vld [vmem:[#allocation3] sm:$0xff]
          %v754 = vadd.f32 %v753, %v737
          %755 = vst [vmem:[#allocation3] sm:$0xff] %v754
        $region68: #{tpu_custom_call.1} parent=43 // pred_fallthru
          _
        // Predicated region
        $region69: #{tpu_custom_call.1} parent=43 // pred_check
          %p756 = pneg %p740
        $region70: #{tpu_custom_call.1} parent=43 // pred_check_branch
          %758 = sbr.rel (%p756) target = $region72
        $region71: #{tpu_custom_call.1} parent=43 // pred_region
          %v759 = vld [vmem:[#allocation2] sm:$0xff]
          %v760 = vld [vmem:[%s414] sm:$0x1]
          %v761 = vld [vmem:[#allocation3] sm:$0xff]
          %v763 = vperm.slane %v760, 0
          %v765 = vmul.f32 %v763, %v761
          %v766 = vadd.f32 %v759, %v765
          %v767 = vld [vmem:[%s417] sm:$0x1]
          %v769 = vperm.slane %v767, 0
          %v771 = vadd.f32 %v766, %v769
          %772 = vst [vmem:[%s407] sm:$0xff] %v771
        $region72: #{tpu_custom_call.1} parent=43 // pred_fallthru
          _
        %s773 = sand.u32 %s213, 1
        %s774 = scalar_lea.sflag [#allocation6], %s773
        %s775 = sand.u32 %s213, 1
        %s776 = smul.addr %s775, 8
        %s777 = scalar_lea.vmem [#allocation11], %s776
        // Predicated region
        $region73: #{tpu_custom_call.1} parent=43 // pred_check
          %p778 = pneg %p223
        $region74: #{tpu_custom_call.1} parent=43 // pred_check_branch
          %780 = sbr.rel (%p778) target = $region76
        $region75: #{tpu_custom_call.1} parent=43 // pred_region
          %782 = vsyncadd %s774, 0
          %s783 = smul.addr %s27, 2
          %s784 = sadd.s32 %s28, %s783
          %s785 = smul.addr %s784, 8
          %s786 = scalar_lea.hbm %s6, %s785
          %s788 = sshll.u32 %s777, 4
          %s789 = int_to_ptr.vmem [resolvable:$true] %s788
          %s790 = sshll.u32 %s786, 4
          %s791 = int_to_ptr.hbm [resolvable:$true] %s790
          %793 = dma.vmem_to_hbm [thread:$0]  %s789, 128, %s791, %s774
        $region76: #{tpu_custom_call.1} parent=43 // pred_fallthru
          _
      $region44: #{tpu_custom_call.1} parent=5 // pred_fallthru
        _
      %p794 = scmp.le.s32.totalorder 2, %s17
      // Predicated region
      $region77: #{tpu_custom_call.1} parent=5 // pred_check
        %p795 = pneg %p794
      $region78: #{tpu_custom_call.1} parent=5 // pred_check_branch
        %797 = sbr.rel (%p795) target = $region80
      $region79: #{tpu_custom_call.1} parent=5 // pred_region
        %s798 = ssub.s32 %s17, 2
        // Predicated region
        $region81: #{tpu_custom_call.1} parent=79 // pred_check
          %p799 = pneg %p229
        $region82: #{tpu_custom_call.1} parent=79 // pred_check_branch
          %801 = sbr.rel (%p799) target = $region84
        $region83: #{tpu_custom_call.1} parent=79 // pred_region
          %s802 = sand.u32 %s214, 1
          %s803 = scalar_lea.sflag [#allocation6], %s802
          %s804 = sand.u32 %s214, 1
          %s805 = smul.addr %s804, 8
          %s806 = scalar_lea.vmem [#allocation11], %s805
          %808 = dma.done %s803, 128
        $region84: #{tpu_custom_call.1} parent=79 // pred_fallthru
          _
      $region80: #{tpu_custom_call.1} parent=5 // pred_fallthru
        _
    $region6: #{tpu_custom_call.1} parent=1 // loop_footer
      %s21 = sadd.s32 1, %s17
    $region7: #{tpu_custom_call.1} parent=1 // loop_footer_branch
      %16 = sbr.rel target = $region3
    $region8: #{tpu_custom_call.1} parent=1 // loop_exit
      _
    %809 = vsyncpa [#allocation5], 1
    %s810 = scalar_lea.sflag [#allocation5], 1
    %811 = vsyncpa %s810, 1
    %812 = vsyncpa [#allocation8], 1
    %813 = vsyncpa [#allocation6], 1
    %s814 = scalar_lea.sflag [#allocation6], 1
    %815 = vsyncpa %s814, 1

</llo_original>
